<compile_context>
chip_gen: v6e
topology: v6e:2x2x1
jax: 0.10.0
libtpu: 0.0.40
codegen_flags: <defaults>
</compile_context>

<pallas_src>
import functools

import jax
import jax.numpy as jnp
from jax.experimental import pallas as pl
from jax.experimental.pallas import tpu as pltpu


def _fusion_loss_kernel(feat_ref, x_ref, y_ref, rowmap_ref, colmap_ref,
                        out_ref, bce_acc, l1_acc, cnt_acc,
                        *, inv_hw, inv_r2, r1_sq):
    # feat_ref: (3, L, T)       x_ref / y_ref: (L, 1)
    # rowmap_ref / colmap_ref: (1, T)
    # out_ref: (L, 1)           accumulators: (L, 1) f32 scratch
    k = pl.program_id(1)

    @pl.when(k == 0)
    def _init():
        bce_acc[...] = jnp.zeros_like(bce_acc)
        l1_acc[...] = jnp.zeros_like(l1_acc)
        cnt_acc[...] = jnp.zeros_like(cnt_acc)

    heat = feat_ref[0].astype(jnp.float32)   # heatmap logits
    offx = feat_ref[1].astype(jnp.float32)   # predicted x-offsets
    offy = feat_ref[2].astype(jnp.float32)   # predicted y-offsets

    # (row - X), (col - Y) broadcast to (L, T); reused for dist^2, the mask
    # and the analytic GT offsets (gt_offx = -dx/R2, gt_offy = -dy/R2).
    dx = rowmap_ref[...] - x_ref[...]
    dy = colmap_ref[...] - y_ref[...]
    dist2 = dx * dx + dy * dy
    mask = dist2 <= jnp.float32(r1_sq)
    gt = mask.astype(jnp.float32)            # binary heatmap ground truth

    # Numerically stable BCE-with-logits, per pixel, summed over this chunk.
    bce = jnp.maximum(heat, 0.0) - heat * gt + jnp.log1p(jnp.exp(-jnp.abs(heat)))
    bce_acc[...] += jnp.sum(bce, axis=-1, keepdims=True)

    # Masked L1 on both offset maps, fused into a single reduction.
    l1_abs = jnp.abs(offx + dx * jnp.float32(inv_r2)) \
           + jnp.abs(offy + dy * jnp.float32(inv_r2))
    l1_acc[...] += jnp.sum(jnp.where(mask, l1_abs, 0.0), axis=-1, keepdims=True)
    cnt_acc[...] += jnp.sum(gt, axis=-1, keepdims=True)   # >= 1 always

    @pl.when(k == pl.num_programs(1) - 1)
    def _finalize():
        out_ref[...] = (2.0 * jnp.float32(inv_hw)) * bce_acc[...] \
                     + l1_acc[...] / cnt_acc[...]


def _pick_hw_tile(hw, num_landmarks, max_bytes=8 * 1024 * 1024):
    """Largest spatial chunk T s.t. the (3, L, T) f32 tile fits the budget.

    T must be a multiple of 128 that divides HW (or HW itself); the pipeline
    double-buffers the feature tile, so keep comfortable headroom in VMEM.
    """
    max_elems = max(128, max_bytes // (3 * num_landmarks * 4))
    if hw <= max_elems:
        return hw
    t = (max_elems // 128) * 128
    while t >= 128:
        if hw % t == 0:
            return t
        t -= 128
    return hw  # no nice divisor: fall back to a single full-width tile


def fusion_loss_pallas(feature_maps, landmarks, *, R1, R2):
    B, C, H, W = feature_maps.shape
    L = C // 3
    HW = H * W
    T = _pick_hw_tile(HW, L)
    K = HW // T

    # Free reshape: channels (3L) -> (3, L); spatial flattened lane-dense.
    feat = feature_maps.reshape(B, 3, L, HW)

    # Landmark pixel coordinates, pre-shaped for (L, T) broadcasting.
    Xf = jnp.round(landmarks[:, :, 0] * (H - 1)).astype(jnp.float32).reshape(B, L, 1)
    Yf = jnp.round(landmarks[:, :, 1] * (W - 1)).astype(jnp.float32).reshape(B, L, 1)

    # Row / column index maps over the flattened spatial axis.
    idx = jnp.arange(HW, dtype=jnp.int32)
    rowmap = (idx // W).astype(jnp.float32).reshape(1, HW)
    colmap = (idx % W).astype(jnp.float32).reshape(1, HW)

    kernel = functools.partial(
        _fusion_loss_kernel,
        inv_hw=1.0 / float(HW),
        inv_r2=1.0 / float(R2),
        r1_sq=float(R1 * R1),
    )

    partials = pl.pallas_call(
        kernel,
        out_shape=jax.ShapeDtypeStruct((B, L, 1), jnp.float32),
        grid=(B, K),
        in_specs=[
            pl.BlockSpec((pl.Squeezed(), 3, L, T), lambda b, k: (b, 0, 0, k)),
            pl.BlockSpec((pl.Squeezed(), L, 1), lambda b, k: (b, 0, 0)),
            pl.BlockSpec((pl.Squeezed(), L, 1), lambda b, k: (b, 0, 0)),
            pl.BlockSpec((1, T), lambda b, k: (0, k)),
            pl.BlockSpec((1, T), lambda b, k: (0, k)),
        ],
        out_specs=pl.BlockSpec((pl.Squeezed(), L, 1), lambda b, k: (b, 0, 0)),
        scratch_shapes=[
            pltpu.VMEM((L, 1), jnp.float32),   # BCE sum
            pltpu.VMEM((L, 1), jnp.float32),   # masked L1 sum
            pltpu.VMEM((L, 1), jnp.float32),   # mask count
        ],
        compiler_params=pltpu.CompilerParams(
            dimension_semantics=("parallel", "arbitrary")),
    )(feat, Xf, Yf, rowmap, colmap)

    # Final mean over all (image, landmark) pairs.
    return jnp.sum(partials) / float(B * L)


def fusion_loss_ref(feature_maps, landmarks, *, R1, R2):
    """Pure-JAX reference matching the PyTorch forward semantics."""
    B, C, h, w = feature_maps.shape
    L = C // 3
    X = jnp.round(landmarks[:, :, 0] * (h - 1)).astype(jnp.int32)
    Y = jnp.round(landmarks[:, :, 1] * (w - 1)).astype(jnp.int32)
    row = jnp.arange(h, dtype=jnp.float32).reshape(1, 1, h, 1)
    col = jnp.arange(w, dtype=jnp.float32).reshape(1, 1, 1, w)
    Xf = X.astype(jnp.float32)[:, :, None, None]
    Yf = Y.astype(jnp.float32)[:, :, None, None]
    dist2 = (row - Xf) ** 2 + (col - Yf) ** 2
    gt = (dist2 <= float(R1 * R1)).astype(jnp.float32)

    heat = feature_maps[:, :L]
    offx = feature_maps[:, L:2 * L]
    offy = feature_maps[:, 2 * L:]

    bce = jnp.maximum(heat, 0.0) - heat * gt + jnp.log1p(jnp.exp(-jnp.abs(heat)))
    bce_mean = bce.mean(axis=(2, 3))

    gtx = (Xf - row) / float(R2)
    gty = (Yf - col) / float(R2)
    cnt = gt.sum(axis=(2, 3))
    l1x = (jnp.abs(offx - gtx) * gt).sum(axis=(2, 3)) / cnt
    l1y = (jnp.abs(offy - gty) * gt).sum(axis=(2, 3)) / cnt

    return (2.0 * bce_mean + l1x + l1y).mean()


if __name__ == "__main__":
    # Small, deterministic problem: B=2 images, L=4 landmarks, 16x16 maps.
    B, L, H, W = 2, 4, 16, 16
    R1, R2 = 2, 4

    key = jax.random.PRNGKey(0)
    k_feat, k_lm = jax.random.split(key)
    feature_maps = jax.random.normal(k_feat, (B, 3 * L, H, W), dtype=jnp.float32)
    landmarks = jax.random.uniform(k_lm, (B, L, 2), dtype=jnp.float32,
                                   minval=0.1, maxval=0.9)

    loss = fusion_loss_pallas(feature_maps, landmarks, R1=R1, R2=R2)
    loss = jax.block_until_ready(loss)

    ref = fusion_loss_ref(feature_maps, landmarks, R1=R1, R2=R2)
    ref = jax.block_until_ready(ref)

    assert jnp.isfinite(loss), "non-finite loss from kernel"
    assert abs(float(loss) - float(ref)) < 1e-4, (float(loss), float(ref))
    print("KERNEL_OK")
</pallas_src>

<mosaic_0001>
module attributes {stable_mosaic.version = 11 : i64} {
  func.func @_fusion_loss_kernel(%arg0: i32, %arg1: i32, %arg2: memref<1x3x4x256xf32, #tpu.memory_space<vmem>>, %arg3: memref<1x4x1xf32, #tpu.memory_space<vmem>>, %arg4: memref<1x4x1xf32, #tpu.memory_space<vmem>>, %arg5: memref<1x256xf32, #tpu.memory_space<vmem>>, %arg6: memref<1x256xf32, #tpu.memory_space<vmem>>, %arg7: memref<1x4x1xf32, #tpu.memory_space<vmem>>, %arg8: memref<4x1xf32, #tpu.memory_space<vmem>>, %arg9: memref<4x1xf32, #tpu.memory_space<vmem>>, %arg10: memref<4x1xf32, #tpu.memory_space<vmem>>) attributes {dimension_semantics = [#tpu.dimension_semantics<parallel>, #tpu.dimension_semantics<arbitrary>], iteration_bounds = array<i64: 2, 1>, scalar_prefetch = 0 : i64, scratch_operands = 3 : i64, tpu.core_type = #tpu.core_type<tc>, window_params = [{transform_indices = @transform_0, window_bounds = array<i64: 1, 3, 4, 256>}, {transform_indices = @transform_1, window_bounds = array<i64: 1, 4, 1>}, {transform_indices = @transform_2, window_bounds = array<i64: 1, 4, 1>}, {transform_indices = @transform_3, window_bounds = array<i64: 1, 256>}, {transform_indices = @transform_4, window_bounds = array<i64: 1, 256>}, {transform_indices = @transform_5, window_bounds = array<i64: 1, 4, 1>}]} {
    %c0_i32 = arith.constant 0 : i32
    %0 = arith.cmpi eq, %arg1, %c0_i32 : i32
    %1 = arith.extui %0 : i1 to i32
    %c0_i32_0 = arith.constant 0 : i32
    %2 = arith.cmpi ne, %1, %c0_i32_0 : i32
    scf.if %2 {
      %cst_42 = arith.constant 0.000000e+00 : f32
      %67 = vector.broadcast %cst_42 : f32 to vector<4x1xf32>
      %c0_43 = arith.constant 0 : index
      %c0_44 = arith.constant 0 : index
      %68 = vector.load %arg8[%c0_43, %c0_44] : memref<4x1xf32, #tpu.memory_space<vmem>>, vector<4x1xf32>
      tpu.vector_store %arg8[%c0_43, %c0_44], %67 {strides = array<i32>} : memref<4x1xf32, #tpu.memory_space<vmem>>, vector<4x1xf32>,
      %cst_45 = arith.constant 0.000000e+00 : f32
      %69 = vector.broadcast %cst_45 : f32 to vector<4x1xf32>
      %c0_46 = arith.constant 0 : index
      %c0_47 = arith.constant 0 : index
      %70 = vector.load %arg9[%c0_46, %c0_47] : memref<4x1xf32, #tpu.memory_space<vmem>>, vector<4x1xf32>
      tpu.vector_store %arg9[%c0_46, %c0_47], %69 {strides = array<i32>} : memref<4x1xf32, #tpu.memory_space<vmem>>, vector<4x1xf32>,
      %cst_48 = arith.constant 0.000000e+00 : f32
      %71 = vector.broadcast %cst_48 : f32 to vector<4x1xf32>
      %c0_49 = arith.constant 0 : index
      %c0_50 = arith.constant 0 : index
      %72 = vector.load %arg10[%c0_49, %c0_50] : memref<4x1xf32, #tpu.memory_space<vmem>>, vector<4x1xf32>
      tpu.vector_store %arg10[%c0_49, %c0_50], %71 {strides = array<i32>} : memref<4x1xf32, #tpu.memory_space<vmem>>, vector<4x1xf32>,
    } else {
    }
    %c0 = arith.constant 0 : index
    %c0_1 = arith.constant 0 : index
    %c0_2 = arith.constant 0 : index
    %c0_3 = arith.constant 0 : index
    %3 = vector.load %arg2[%c0, %c0_1, %c0_2, %c0_3] : memref<1x3x4x256xf32, #tpu.memory_space<vmem>>, vector<1x1x4x256xf32>
    %4 = vector.shape_cast %3 : vector<1x1x4x256xf32> to vector<4x256xf32>
    %c0_4 = arith.constant 0 : index
    %c1 = arith.constant 1 : index
    %c0_5 = arith.constant 0 : index
    %c0_6 = arith.constant 0 : index
    %5 = vector.load %arg2[%c0_4, %c1, %c0_5, %c0_6] : memref<1x3x4x256xf32, #tpu.memory_space<vmem>>, vector<1x1x4x256xf32>
    %6 = vector.shape_cast %5 : vector<1x1x4x256xf32> to vector<4x256xf32>
    %c0_7 = arith.constant 0 : index
    %c2 = arith.constant 2 : index
    %c0_8 = arith.constant 0 : index
    %c0_9 = arith.constant 0 : index
    %7 = vector.load %arg2[%c0_7, %c2, %c0_8, %c0_9] : memref<1x3x4x256xf32, #tpu.memory_space<vmem>>, vector<1x1x4x256xf32>
    %8 = vector.shape_cast %7 : vector<1x1x4x256xf32> to vector<4x256xf32>
    %c0_10 = arith.constant 0 : index
    %c0_11 = arith.constant 0 : index
    %9 = vector.load %arg5[%c0_10, %c0_11] : memref<1x256xf32, #tpu.memory_space<vmem>>, vector<1x256xf32>
    %c0_12 = arith.constant 0 : index
    %c0_13 = arith.constant 0 : index
    %c0_14 = arith.constant 0 : index
    %10 = vector.load %arg3[%c0_12, %c0_13, %c0_14] : memref<1x4x1xf32, #tpu.memory_space<vmem>>, vector<1x4x1xf32>
    %11 = vector.shape_cast %10 : vector<1x4x1xf32> to vector<4x1xf32>
    %12 = vector.broadcast %9 : vector<1x256xf32> to vector<4x256xf32>
    %13 = vector.broadcast %11 : vector<4x1xf32> to vector<4x256xf32>
    %14 = arith.subf %12, %13 : vector<4x256xf32>
    %c0_15 = arith.constant 0 : index
    %c0_16 = arith.constant 0 : index
    %15 = vector.load %arg6[%c0_15, %c0_16] : memref<1x256xf32, #tpu.memory_space<vmem>>, vector<1x256xf32>
    %c0_17 = arith.constant 0 : index
    %c0_18 = arith.constant 0 : index
    %c0_19 = arith.constant 0 : index
    %16 = vector.load %arg4[%c0_17, %c0_18, %c0_19] : memref<1x4x1xf32, #tpu.memory_space<vmem>>, vector<1x4x1xf32>
    %17 = vector.shape_cast %16 : vector<1x4x1xf32> to vector<4x1xf32>
    %18 = vector.broadcast %15 : vector<1x256xf32> to vector<4x256xf32>
    %19 = vector.broadcast %17 : vector<4x1xf32> to vector<4x256xf32>
    %20 = arith.subf %18, %19 : vector<4x256xf32>
    %21 = arith.mulf %14, %14 : vector<4x256xf32>
    %22 = arith.mulf %20, %20 : vector<4x256xf32>
    %23 = arith.addf %21, %22 : vector<4x256xf32>
    %cst = arith.constant 4.000000e+00 : f32
    %24 = vector.broadcast %cst : f32 to vector<4x256xf32>
    %25 = arith.cmpf ole, %23, %24 : vector<4x256xf32>
    %26 = arith.extui %25 : vector<4x256xi1> to vector<4x256xi32>
    %27 = arith.sitofp %26 : vector<4x256xi32> to vector<4x256xf32>
    %cst_20 = arith.constant 0.000000e+00 : f32
    %28 = vector.broadcast %cst_20 : f32 to vector<4x256xf32>
    %29 = arith.maximumf %4, %28 : vector<4x256xf32>
    %30 = arith.mulf %4, %27 : vector<4x256xf32>
    %31 = arith.subf %29, %30 : vector<4x256xf32>
    %32 = math.absf %4 : vector<4x256xf32>
    %cst_21 = arith.constant 0.000000e+00 : f32
    %33 = vector.broadcast %cst_21 : f32 to vector<4x256xf32>
    %34 = arith.subf %33, %32 : vector<4x256xf32>
    %35 = math.exp %34 : vector<4x256xf32>
    %36 = math.log1p %35 : vector<4x256xf32>
    %37 = arith.addf %31, %36 : vector<4x256xf32>
    %c0_22 = arith.constant 0 : index
    %c0_23 = arith.constant 0 : index
    %38 = vector.load %arg8[%c0_22, %c0_23] : memref<4x1xf32, #tpu.memory_space<vmem>>, vector<4x1xf32>
    %cst_24 = arith.constant dense<0.000000e+00> : vector<4xf32>
    %39 = vector.multi_reduction <add>, %37, %cst_24 [1] : vector<4x256xf32> to vector<4xf32>
    %40 = vector.shape_cast %39 : vector<4xf32> to vector<4x1xf32>
    %41 = arith.addf %38, %40 : vector<4x1xf32>
    %c0_25 = arith.constant 0 : index
    %c0_26 = arith.constant 0 : index
    %42 = vector.load %arg8[%c0_25, %c0_26] : memref<4x1xf32, #tpu.memory_space<vmem>>, vector<4x1xf32>
    tpu.vector_store %arg8[%c0_25, %c0_26], %41 {strides = array<i32>} : memref<4x1xf32, #tpu.memory_space<vmem>>, vector<4x1xf32>,
    %cst_27 = arith.constant 2.500000e-01 : f32
    %43 = vector.broadcast %cst_27 : f32 to vector<4x256xf32>
    %44 = arith.mulf %14, %43 : vector<4x256xf32>
    %45 = arith.addf %6, %44 : vector<4x256xf32>
    %46 = math.absf %45 : vector<4x256xf32>
    %cst_28 = arith.constant 2.500000e-01 : f32
    %47 = vector.broadcast %cst_28 : f32 to vector<4x256xf32>
    %48 = arith.mulf %20, %47 : vector<4x256xf32>
    %49 = arith.addf %8, %48 : vector<4x256xf32>
    %50 = math.absf %49 : vector<4x256xf32>
    %51 = arith.addf %46, %50 : vector<4x256xf32>
    %c0_29 = arith.constant 0 : index
    %c0_30 = arith.constant 0 : index
    %52 = vector.load %arg9[%c0_29, %c0_30] : memref<4x1xf32, #tpu.memory_space<vmem>>, vector<4x1xf32>
    %cst_31 = arith.constant 0.000000e+00 : f32
    %53 = vector.broadcast %cst_31 : f32 to vector<4x256xf32>
    %54 = arith.select %25, %51, %53 : vector<4x256xi1>, vector<4x256xf32>
    %cst_32 = arith.constant dense<0.000000e+00> : vector<4xf32>
    %55 = vector.multi_reduction <add>, %54, %cst_32 [1] : vector<4x256xf32> to vector<4xf32>
    %56 = vector.shape_cast %55 : vector<4xf32> to vector<4x1xf32>
    %57 = arith.addf %52, %56 : vector<4x1xf32>
    %c0_33 = arith.constant 0 : index
    %c0_34 = arith.constant 0 : index
    %58 = vector.load %arg9[%c0_33, %c0_34] : memref<4x1xf32, #tpu.memory_space<vmem>>, vector<4x1xf32>
    tpu.vector_store %arg9[%c0_33, %c0_34], %57 {strides = array<i32>} : memref<4x1xf32, #tpu.memory_space<vmem>>, vector<4x1xf32>,
    %c0_35 = arith.constant 0 : index
    %c0_36 = arith.constant 0 : index
    %59 = vector.load %arg10[%c0_35, %c0_36] : memref<4x1xf32, #tpu.memory_space<vmem>>, vector<4x1xf32>
    %cst_37 = arith.constant dense<0.000000e+00> : vector<4xf32>
    %60 = vector.multi_reduction <add>, %27, %cst_37 [1] : vector<4x256xf32> to vector<4xf32>
    %61 = vector.shape_cast %60 : vector<4xf32> to vector<4x1xf32>
    %62 = arith.addf %59, %61 : vector<4x1xf32>
    %c0_38 = arith.constant 0 : index
    %c0_39 = arith.constant 0 : index
    %63 = vector.load %arg10[%c0_38, %c0_39] : memref<4x1xf32, #tpu.memory_space<vmem>>, vector<4x1xf32>
    tpu.vector_store %arg10[%c0_38, %c0_39], %62 {strides = array<i32>} : memref<4x1xf32, #tpu.memory_space<vmem>>, vector<4x1xf32>,
    %c0_i32_40 = arith.constant 0 : i32
    %64 = arith.cmpi eq, %arg1, %c0_i32_40 : i32
    %65 = arith.extui %64 : i1 to i32
    %c0_i32_41 = arith.constant 0 : i32
    %66 = arith.cmpi ne, %65, %c0_i32_41 : i32
    scf.if %66 {
      %cst_42 = arith.constant 2.000000e+00 : f32
      %cst_43 = arith.constant 3.906250e-03 : f32
      %67 = arith.mulf %cst_42, %cst_43 : f32
      %c0_44 = arith.constant 0 : index
      %c0_45 = arith.constant 0 : index
      %68 = vector.load %arg8[%c0_44, %c0_45] : memref<4x1xf32, #tpu.memory_space<vmem>>, vector<4x1xf32>
      %69 = vector.broadcast %67 : f32 to vector<4x1xf32>
      %70 = arith.mulf %69, %68 : vector<4x1xf32>
      %c0_46 = arith.constant 0 : index
      %c0_47 = arith.constant 0 : index
      %71 = vector.load %arg9[%c0_46, %c0_47] : memref<4x1xf32, #tpu.memory_space<vmem>>, vector<4x1xf32>
      %c0_48 = arith.constant 0 : index
      %c0_49 = arith.constant 0 : index
      %72 = vector.load %arg10[%c0_48, %c0_49] : memref<4x1xf32, #tpu.memory_space<vmem>>, vector<4x1xf32>
      %73 = arith.divf %71, %72 : vector<4x1xf32>
      %74 = arith.addf %70, %73 : vector<4x1xf32>
      %c0_50 = arith.constant 0 : index
      %c0_51 = arith.constant 0 : index
      %c0_52 = arith.constant 0 : index
      %75 = vector.load %arg7[%c0_50, %c0_51, %c0_52] : memref<1x4x1xf32, #tpu.memory_space<vmem>>, vector<1x4x1xf32>
      %76 = vector.shape_cast %75 : vector<1x4x1xf32> to vector<4x1xf32>
      %77 = vector.shape_cast %74 : vector<4x1xf32> to vector<1x4x1xf32>
      tpu.vector_store %arg7[%c0_50, %c0_51, %c0_52], %77 {strides = array<i32>} : memref<1x4x1xf32, #tpu.memory_space<vmem>>, vector<1x4x1xf32>,
    } else {
    }
    return
  }
  func.func @transform_0(%arg0: i32, %arg1: i32) -> (i32, i32, i32, i32) {
    %c0_i32 = arith.constant 0 : i32
    %c0_i32_0 = arith.constant 0 : i32
    %c0_i32_1 = arith.constant 0 : i32
    return %arg0, %c0_i32, %c0_i32_0, %arg1 : i32, i32, i32, i32
  }
  func.func @transform_1(%arg0: i32, %arg1: i32) -> (i32, i32, i32) {
    %c0_i32 = arith.constant 0 : i32
    %c0_i32_0 = arith.constant 0 : i32
    %c0_i32_1 = arith.constant 0 : i32
    return %arg0, %c0_i32, %c0_i32_0 : i32, i32, i32
  }
  func.func @transform_2(%arg0: i32, %arg1: i32) -> (i32, i32, i32) {
    %c0_i32 = arith.constant 0 : i32
    %c0_i32_0 = arith.constant 0 : i32
    %c0_i32_1 = arith.constant 0 : i32
    return %arg0, %c0_i32, %c0_i32_0 : i32, i32, i32
  }
  func.func @transform_3(%arg0: i32, %arg1: i32) -> (i32, i32) {
    %c0_i32 = arith.constant 0 : i32
    %c0_i32_0 = arith.constant 0 : i32
    return %c0_i32, %arg1 : i32, i32
  }
  func.func @transform_4(%arg0: i32, %arg1: i32) -> (i32, i32) {
    %c0_i32 = arith.constant 0 : i32
    %c0_i32_0 = arith.constant 0 : i32
    return %c0_i32, %arg1 : i32, i32
  }
  func.func @transform_5(%arg0: i32, %arg1: i32) -> (i32, i32, i32) {
    %c0_i32 = arith.constant 0 : i32
    %c0_i32_0 = arith.constant 0 : i32
    %c0_i32_1 = arith.constant 0 : i32
    return %arg0, %c0_i32, %c0_i32_0 : i32, i32, i32
  }
}

</mosaic_0001>

<llo_original>
// kernel: tpu_custom_call.1
$region0: #{tpu_custom_call.1}
  #allocation0 [shape = 'u32[]', space=smem, size = 0x4, offset = 0x4, fixed_abs, tag = 'smem constant byte address 0x4 - core index']
  #allocation1 [shape = 'u32[144,128]{1,0:T(1,128)}', space=vmem, size = 0x12000, scoped, tag = 'internal scratch']
  #allocation2 [shape = 'f32[4,1]{1,0:T(4,128)}', space=vmem, size = 0x800, scoped, tag = 'scratch operand']
  #allocation3 [shape = 'f32[4,1]{1,0:T(4,128)}', space=vmem, size = 0x800, scoped, tag = 'scratch operand']
  #allocation4 [shape = 'f32[4,1]{1,0:T(4,128)}', space=vmem, size = 0x800, scoped, tag = 'scratch operand']
  %s0 = inlined_call_operand.hbm [shape: f32[2,3,4,256], index: 0, kind: input, shape index: {}]
  %s1 = inlined_call_operand.vmem [shape: f32[2,4,1], index: 1, kind: input, shape index: {}]
  %s2 = inlined_call_operand.vmem [shape: f32[2,4,1], index: 2, kind: input, shape index: {}]
  %s3 = inlined_call_operand.vmem [shape: f32[1,256], index: 3, kind: input, shape index: {}]
  %s4 = inlined_call_operand.vmem [shape: f32[1,256], index: 4, kind: input, shape index: {}]
  %s5 = inlined_call_operand.vmem [shape: f32[2,4,1], index: 5, kind: output, shape index: {}]
  %s6 = sld [smem:[#allocation0]]
  $region65: #{tpu_custom_call.1} parent=0
    _
  %s8 = ssub.s32 1, %s6
  %s9 = scalar_select 0, %s8, %s6
  $region1: #{tpu_custom_call.1} parent=0
    #allocation5 [shape = 'u8[24576]{0}', space=vmem, size = 0x6000, scoped, tag = 'input window, operand 0']
    #allocation6 [shape = 's32[2]{0}', space=sflag, size = 0x8, scoped, tag = 'scoped memory for tpu_custom_call.1']
    %10 = vsyncpa [#allocation6], 0
    %s11 = scalar_lea.sflag [#allocation6], 1
    %12 = vsyncpa %s11, 0
    loop: start=0, step=1, limit=4
    $region2: #{tpu_custom_call.1} parent=1 // loop_pre_header
      _
    $region3: #{tpu_custom_call.1} parent=1 // loop_header
      %s14 = sphi 0, %s18
      %p15 = scmp.ge.s32.totalorder %s14, 4
      %s21 = sphi 0, %s33
      %s22 = sphi 0, %s29
      %s23 = sphi 0, %s21
      %s24 = sphi 0, %s22
      %s25 = sphi 0, %s23
      %s26 = sphi 0, %s24
      %s38 = sphi 0, %s40
      %s41 = sphi 0, %s38
      %s42 = sphi 0, %s41
      %s58 = sphi 0, %s42
      %s64 = sphi 0, %s66
      %s67 = sphi 0, %s64
      %s68 = sphi 0, %s67
      %s84 = sphi 0, %s68
      %s90 = sphi 0, %s92
      %s93 = sphi 0, %s90
      %s94 = sphi 0, %s93
      %s110 = sphi 0, %s94
      %s116 = sphi 0, %s118
      %s119 = sphi 0, %s116
      %s120 = sphi 0, %s119
      %s136 = sphi 0, %s120
      %s142 = sphi 0, %s144
      %s145 = sphi 0, %s142
      %s146 = sphi 0, %s145
      %s162 = sphi 0, %s146
      %s168 = sphi 0, %s170
      %s171 = sphi 0, %s168
      %s172 = sphi 0, %s171
      %s188 = sphi 0, %s172
    $region4: #{tpu_custom_call.1} parent=1 // loop_header_branch
      %17 = sbr.rel (%p15) target = $region8
    $region5: #{tpu_custom_call.1} parent=1 // loop_body
      %s19 = ssub.s32 %s14, 1
      %s20 = ssub.s32 %s14, 2
      %s27 = sadd.s32 1, %s22
      %p28 = scmp.ge.s32.totalorder %s27, 1
      %s29 = scalar_select %p28, 0, %s27
      %s30 = sadd.s32 1, %s21
      %s31 = scalar_select %p28, %s30, %s21
      %p32 = scmp.ge.s32.totalorder %s31, 2
      %s33 = scalar_select %p32, 0, %s31
      %s34 = ssub.s32 %s21, %s33
      %s35 = ssub.s32 %s22, %s29
      %s36 = sor.u32 %s34, %s35
      %p37 = scmp.eq.s32.totalorder %s36, 0
      %s39 = sadd.s32 %s38, 1
      %s40 = scalar_select %p37, %s38, %s39
      %p43 = pneg %p37
      %p44 = scmp.eq.s32.totalorder %s14, 1
      %p45 = por %p43, %p44
      %p46 = scmp.ne.s32.totalorder %s38, %s41
      %p47 = scmp.eq.s32.totalorder %s14, 0
      %p48 = por %p46, %p47
      %p49 = scmp.ne.s32.totalorder %s38, %s41
      %p50 = scmp.eq.s32.totalorder %s19, 1
      %p51 = por %p49, %p50
      %p52 = scmp.ne.s32.totalorder %s41, %s42
      %p53 = scmp.eq.s32.totalorder %s19, 0
      %p54 = por %p52, %p53
      %p55 = scmp.ne.s32.totalorder %s41, %s42
      %p56 = scmp.eq.s32.totalorder %s20, 1
      %p57 = por %p55, %p56
      %p59 = scmp.ne.s32.totalorder %s42, %s58
      %p60 = scmp.eq.s32.totalorder %s20, 0
      %p61 = por %p59, %p60
      %s62 = ssub.s32 %s21, %s33
      %p63 = scmp.eq.s32.totalorder %s62, 0
      %s65 = sadd.s32 %s64, 1
      %s66 = scalar_select %p63, %s64, %s65
      %p69 = pneg %p63
      %p70 = scmp.eq.s32.totalorder %s14, 1
      %p71 = por %p69, %p70
      %p72 = scmp.ne.s32.totalorder %s64, %s67
      %p73 = scmp.eq.s32.totalorder %s14, 0
      %p74 = por %p72, %p73
      %p75 = scmp.ne.s32.totalorder %s64, %s67
      %p76 = scmp.eq.s32.totalorder %s19, 1
      %p77 = por %p75, %p76
      %p78 = scmp.ne.s32.totalorder %s67, %s68
      %p79 = scmp.eq.s32.totalorder %s19, 0
      %p80 = por %p78, %p79
      %p81 = scmp.ne.s32.totalorder %s67, %s68
      %p82 = scmp.eq.s32.totalorder %s20, 1
      %p83 = por %p81, %p82
      %p85 = scmp.ne.s32.totalorder %s68, %s84
      %p86 = scmp.eq.s32.totalorder %s20, 0
      %p87 = por %p85, %p86
      %s88 = ssub.s32 %s21, %s33
      %p89 = scmp.eq.s32.totalorder %s88, 0
      %s91 = sadd.s32 %s90, 1
      %s92 = scalar_select %p89, %s90, %s91
      %p95 = pneg %p89
      %p96 = scmp.eq.s32.totalorder %s14, 1
      %p97 = por %p95, %p96
      %p98 = scmp.ne.s32.totalorder %s90, %s93
      %p99 = scmp.eq.s32.totalorder %s14, 0
      %p100 = por %p98, %p99
      %p101 = scmp.ne.s32.totalorder %s90, %s93
      %p102 = scmp.eq.s32.totalorder %s19, 1
      %p103 = por %p101, %p102
      %p104 = scmp.ne.s32.totalorder %s93, %s94
      %p105 = scmp.eq.s32.totalorder %s19, 0
      %p106 = por %p104, %p105
      %p107 = scmp.ne.s32.totalorder %s93, %s94
      %p108 = scmp.eq.s32.totalorder %s20, 1
      %p109 = por %p107, %p108
      %p111 = scmp.ne.s32.totalorder %s94, %s110
      %p112 = scmp.eq.s32.totalorder %s20, 0
      %p113 = por %p111, %p112
      %s114 = ssub.s32 %s22, %s29
      %p115 = scmp.eq.s32.totalorder %s114, 0
      %s117 = sadd.s32 %s116, 1
      %s118 = scalar_select %p115, %s116, %s117
      %p121 = pneg %p115
      %p122 = scmp.eq.s32.totalorder %s14, 1
      %p123 = por %p121, %p122
      %p124 = scmp.ne.s32.totalorder %s116, %s119
      %p125 = scmp.eq.s32.totalorder %s14, 0
      %p126 = por %p124, %p125
      %p127 = scmp.ne.s32.totalorder %s116, %s119
      %p128 = scmp.eq.s32.totalorder %s19, 1
      %p129 = por %p127, %p128
      %p130 = scmp.ne.s32.totalorder %s119, %s120
      %p131 = scmp.eq.s32.totalorder %s19, 0
      %p132 = por %p130, %p131
      %p133 = scmp.ne.s32.totalorder %s119, %s120
      %p134 = scmp.eq.s32.totalorder %s20, 1
      %p135 = por %p133, %p134
      %p137 = scmp.ne.s32.totalorder %s120, %s136
      %p138 = scmp.eq.s32.totalorder %s20, 0
      %p139 = por %p137, %p138
      %s140 = ssub.s32 %s22, %s29
      %p141 = scmp.eq.s32.totalorder %s140, 0
      %s143 = sadd.s32 %s142, 1
      %s144 = scalar_select %p141, %s142, %s143
      %p147 = pneg %p141
      %p148 = scmp.eq.s32.totalorder %s14, 1
      %p149 = por %p147, %p148
      %p150 = scmp.ne.s32.totalorder %s142, %s145
      %p151 = scmp.eq.s32.totalorder %s14, 0
      %p152 = por %p150, %p151
      %p153 = scmp.ne.s32.totalorder %s142, %s145
      %p154 = scmp.eq.s32.totalorder %s19, 1
      %p155 = por %p153, %p154
      %p156 = scmp.ne.s32.totalorder %s145, %s146
      %p157 = scmp.eq.s32.totalorder %s19, 0
      %p158 = por %p156, %p157
      %p159 = scmp.ne.s32.totalorder %s145, %s146
      %p160 = scmp.eq.s32.totalorder %s20, 1
      %p161 = por %p159, %p160
      %p163 = scmp.ne.s32.totalorder %s146, %s162
      %p164 = scmp.eq.s32.totalorder %s20, 0
      %p165 = por %p163, %p164
      %s166 = ssub.s32 %s21, %s33
      %p167 = scmp.eq.s32.totalorder %s166, 0
      %s169 = sadd.s32 %s168, 1
      %s170 = scalar_select %p167, %s168, %s169
      %p173 = pneg %p167
      %p174 = scmp.eq.s32.totalorder %s14, 1
      %p175 = por %p173, %p174
      %p176 = scmp.ne.s32.totalorder %s168, %s171
      %p177 = scmp.eq.s32.totalorder %s14, 0
      %p178 = por %p176, %p177
      %p179 = scmp.ne.s32.totalorder %s168, %s171
      %p180 = scmp.eq.s32.totalorder %s19, 1
      %p181 = por %p179, %p180
      %p182 = scmp.ne.s32.totalorder %s171, %s172
      %p183 = scmp.eq.s32.totalorder %s19, 0
      %p184 = por %p182, %p183
      %p185 = scmp.ne.s32.totalorder %s171, %s172
      %p186 = scmp.eq.s32.totalorder %s20, 1
      %p187 = por %p185, %p186
      %p189 = scmp.ne.s32.totalorder %s172, %s188
      %p190 = scmp.eq.s32.totalorder %s20, 0
      %p191 = por %p189, %p190
      %p192 = scmp.le.s32.totalorder 1, %s14
      %p193 = scmp.lt.s32.totalorder %s14, 3
      %p194 = pnand %p192, %p193
      %p195 = pneg %p194
      // Predicated region
      $region9: #{tpu_custom_call.1} parent=5 // pred_check
        _
      $region10: #{tpu_custom_call.1} parent=5 // pred_check_branch
        %197 = sbr.rel (%p194) target = $region12
      $region11: #{tpu_custom_call.1} parent=5 // pred_region
        %s198 = ssub.s32 %s14, 1
        // Predicated region
        $region13: #{tpu_custom_call.1} parent=11 // pred_check
          %p199 = pneg %p132
        $region14: #{tpu_custom_call.1} parent=11 // pred_check_branch
          %201 = sbr.rel (%p199) target = $region16
        $region15: #{tpu_custom_call.1} parent=11 // pred_region
          %s202 = smul.u32 2, %s24
          %p203 = scmp.lt.s32.totalorder %s202, 1
          %s204 = scalar_select %p203, %s202, 1
          %s205 = scalar_lea.vmem %s3, %s204
          %s206 = smul.u32 2, %s24
        $region16: #{tpu_custom_call.1} parent=11 // pred_fallthru
          _
        // Predicated region
        $region17: #{tpu_custom_call.1} parent=11 // pred_check
          %p207 = pneg %p158
        $region18: #{tpu_custom_call.1} parent=11 // pred_check_branch
          %209 = sbr.rel (%p207) target = $region20
        $region19: #{tpu_custom_call.1} parent=11 // pred_region
          %s210 = smul.u32 2, %s24
          %p211 = scmp.lt.s32.totalorder %s210, 1
          %s212 = scalar_select %p211, %s210, 1
          %s213 = scalar_lea.vmem %s4, %s212
          %s214 = smul.u32 2, %s24
        $region20: #{tpu_custom_call.1} parent=11 // pred_fallthru
          _
      $region12: #{tpu_custom_call.1} parent=5 // pred_fallthru
        _
      %p215 = scmp.lt.s32.totalorder %s14, 2
      // Predicated region
      $region21: #{tpu_custom_call.1} parent=5 // pred_check
        %p216 = pneg %p215
      $region22: #{tpu_custom_call.1} parent=5 // pred_check_branch
        %218 = sbr.rel (%p216) target = $region24
      $region23: #{tpu_custom_call.1} parent=5 // pred_region
        // Predicated region
        $region25: #{tpu_custom_call.1} parent=23 // pred_check
          %p219 = pneg %p48
        $region26: #{tpu_custom_call.1} parent=23 // pred_check_branch
          %221 = sbr.rel (%p219) target = $region28
        $region27: #{tpu_custom_call.1} parent=23 // pred_region
          %s222 = sand.u32 %s38, 1
          %s223 = scalar_lea.sflag [#allocation6], %s222
          %s224 = sand.u32 %s38, 1
          %s225 = smul.addr %s224, 24
          %s226 = scalar_lea.vmem [#allocation5], %s225
          %s227 = smul.u32 2, %s22
          %s229 = ssub.s32 384, 384
          %230 = vsyncadd %s223, %s229
          %s231 = smul.addr %s21, 6
          %s232 = sadd.s32 %s227, %s231
          %s233 = smul.addr %s232, 64
          %s234 = scalar_lea.hbm %s0, %s233
          %s235 = sshll.u32 %s226, 4
          %s236 = int_to_ptr.vmem [resolvable:$true] %s235
          %241 = dma.hbm_to_vmem [thread:$0]  %s234, 384, %s236, %s223, 128, 128, 8
        $region28: #{tpu_custom_call.1} parent=23 // pred_fallthru
          _
        // Predicated region
        $region29: #{tpu_custom_call.1} parent=23 // pred_check
          %p242 = pneg %p74
        $region30: #{tpu_custom_call.1} parent=23 // pred_check_branch
          %244 = sbr.rel (%p242) target = $region32
        $region31: #{tpu_custom_call.1} parent=23 // pred_region
          %p245 = scmp.lt.s32.totalorder %s21, 1
          %s246 = scalar_select %p245, %s21, 1
          %s247 = smul.addr %s246, 4
          %s248 = scalar_lea.vmem %s1, %s247
        $region32: #{tpu_custom_call.1} parent=23 // pred_fallthru
          _
        // Predicated region
        $region33: #{tpu_custom_call.1} parent=23 // pred_check
          %p249 = pneg %p100
        $region34: #{tpu_custom_call.1} parent=23 // pred_check_branch
          %251 = sbr.rel (%p249) target = $region36
        $region35: #{tpu_custom_call.1} parent=23 // pred_region
          %p252 = scmp.lt.s32.totalorder %s21, 1
          %s253 = scalar_select %p252, %s21, 1
          %s254 = smul.addr %s253, 4
          %s255 = scalar_lea.vmem %s2, %s254
        $region36: #{tpu_custom_call.1} parent=23 // pred_fallthru
          _
      $region24: #{tpu_custom_call.1} parent=5 // pred_fallthru
        _
      %p256 = scmp.le.s32.totalorder 1, %s14
      %p257 = scmp.lt.s32.totalorder %s14, 3
      %p258 = pnand %p256, %p257
      %p259 = pneg %p258
      // Predicated region
      $region37: #{tpu_custom_call.1} parent=5 // pred_check
        _
      $region38: #{tpu_custom_call.1} parent=5 // pred_check_branch
        %261 = sbr.rel (%p258) target = $region40
      $region39: #{tpu_custom_call.1} parent=5 // pred_region
        %s262 = ssub.s32 %s14, 1
        %s263 = sand.u32 %s41, 1
        %s264 = scalar_lea.sflag [#allocation6], %s263
        %s265 = sand.u32 %s41, 1
        %s266 = smul.addr %s265, 24
        %s267 = scalar_lea.vmem [#allocation5], %s266
        // Predicated region
        $region41: #{tpu_custom_call.1} parent=39 // pred_check
          %p268 = pneg %p54
        $region42: #{tpu_custom_call.1} parent=39 // pred_check_branch
          %270 = sbr.rel (%p268) target = $region44
        $region43: #{tpu_custom_call.1} parent=39 // pred_region
          %271 = dma.done %s264, 384
        $region44: #{tpu_custom_call.1} parent=39 // pred_fallthru
          _
        %s272 = sand.u32 %s41, 1
        %s273 = scalar_lea.sflag [#allocation6], %s272
        %s274 = sand.u32 %s41, 1
        %s275 = smul.addr %s274, 24
        %s276 = scalar_lea.vmem [#allocation5], %s275
        %p277 = pneg %p54
        %p278 = pneg %p51
        %p279 = scmp.lt.s32.totalorder %s23, 1
        %s280 = scalar_select %p279, %s23, 1
        %s281 = smul.addr %s280, 4
        %s282 = scalar_lea.vmem %s1, %s281
        %p283 = pneg %p80
        %p284 = pneg %p77
        %p285 = scmp.lt.s32.totalorder %s23, 1
        %s286 = scalar_select %p285, %s23, 1
        %s287 = smul.addr %s286, 4
        %s288 = scalar_lea.vmem %s2, %s287
        %p289 = pneg %p106
        %p290 = pneg %p103
        %s291 = smul.u32 2, %s24
        %p292 = scmp.lt.s32.totalorder %s291, 1
        %s293 = scalar_select %p292, %s291, 1
        %s294 = scalar_lea.vmem %s3, %s293
        %p295 = pneg %p132
        %p296 = pneg %p129
        %s297 = smul.u32 2, %s24
        %p298 = scmp.lt.s32.totalorder %s297, 1
        %s299 = scalar_select %p298, %s297, 1
        %s300 = scalar_lea.vmem %s4, %s299
        %p301 = pneg %p158
        %p302 = pneg %p155
        %p303 = pneg %p184
        %p304 = pneg %p181
        %p305 = scmp.lt.s32.totalorder %s23, 1
        %s306 = scalar_select %p305, %s23, 1
        %s307 = smul.addr %s306, 4
        %s308 = scalar_lea.vmem %s5, %s307
        %s309 = smul.u32 2, %s24
        %p310 = scmp.lt.s32.totalorder %s23, 1
        %s311 = scalar_select %p310, %s23, 1
        %s312 = smul.addr %s311, 4
        %s313 = scalar_lea.vmem %s1, %s312
        %p314 = scmp.lt.s32.totalorder %s23, 1
        %s315 = scalar_select %p314, %s23, 1
        %s316 = smul.addr %s315, 4
        %s317 = scalar_lea.vmem %s2, %s316
        %s318 = smul.u32 2, %s24
        %p319 = scmp.lt.s32.totalorder %s318, 1
        %s320 = scalar_select %p319, %s318, 1
        %s321 = scalar_lea.vmem %s3, %s320
        %s322 = smul.u32 2, %s24
        %s323 = smul.u32 2, %s24
        %p324 = scmp.lt.s32.totalorder %s323, 1
        %s325 = scalar_select %p324, %s323, 1
        %s326 = scalar_lea.vmem %s4, %s325
        %s327 = smul.u32 2, %s24
        %p328 = scmp.lt.s32.totalorder %s23, 1
        %s329 = scalar_select %p328, %s23, 1
        %s330 = smul.addr %s329, 4
        %s331 = scalar_lea.vmem %s5, %s330
        %p332 = scmp.eq.s32.totalorder %s24, 0
        // Predicated region
        $region45: #{tpu_custom_call.1} parent=39 // pred_check
          %p333 = pneg %p332
        $region46: #{tpu_custom_call.1} parent=39 // pred_check_branch
          %335 = sbr.rel (%p333) target = $region48
        $region47: #{tpu_custom_call.1} parent=39 // pred_region
          %vm336 = vcmask 3072
          %337 = vst.msk [vmem:[#allocation2] sm:$0xf] %vm336, 0.0
          %338 = vst.msk [vmem:[#allocation3] sm:$0xf] %vm336, 0.0
          %339 = vst.msk [vmem:[#allocation4] sm:$0xf] %vm336, 0.0
        $region48: #{tpu_custom_call.1} parent=39 // pred_fallthru
          _
        %v340 = vld [vmem:[%s267] sm:$0xff]
        %s341 = scalar_lea.vmem %s267, 8 [#allocation5]
        %v342 = vld [vmem:[%s341] sm:$0xff]
        %s343 = scalar_lea.vmem %s267, 16 [#allocation5]
        %v344 = vld [vmem:[%s343] sm:$0xff]
        %v345 = vld [vmem:[%s321] sm:$0x3]
        %v346 = vld [vmem:[%s313] sm:$0xf]
        %v348 = vlaneseq
        %v349 = vshrl.u32 %v348, 7
        %v350 = vsub.s32 0, %v349
        %v351 = vrot.slane %v345, %v350
        %v352 = vlaneseq
        %v353 = vshrl.u32 %v352, 7
        %v354 = vsub.s32 1, %v353
        %v355 = vrot.slane %v345, %v354
        %359 = vset.pattern.permute.xlu0 0
        %360 = vperm.xlu0 %359, %v346
        %v361 = vpop.permute.xlu0 %360
        %v363 = vsub.f32 %v351, %v361
        %v364 = vsub.f32 %v355, %v361
        %v365 = vld [vmem:[%s326] sm:$0x3]
        %v366 = vld [vmem:[%s317] sm:$0xf]
        %v368 = vlaneseq
        %v369 = vshrl.u32 %v368, 7
        %v370 = vsub.s32 0, %v369
        %v371 = vrot.slane %v365, %v370
        %v372 = vlaneseq
        %v373 = vshrl.u32 %v372, 7
        %v374 = vsub.s32 1, %v373
        %v375 = vrot.slane %v365, %v374
        %379 = vset.pattern.permute.xlu0 0
        %380 = vperm.xlu0 %379, %v366
        %v381 = vpop.permute.xlu0 %380
        %v383 = vsub.f32 %v371, %v381
        %v384 = vsub.f32 %v375, %v381
        %v385 = vmul.f32 %v363, %v363
        %v386 = vmul.f32 %v364, %v364
        %v387 = vmul.f32 %v383, %v383
        %v388 = vmul.f32 %v384, %v384
        %v389 = vadd.f32 %v385, %v387
        %v390 = vadd.f32 %v386, %v388
        %vm391 = vcmp.le.f32.partialorder %v389, 4.0
        %vm392 = vcmp.le.f32.partialorder %v390, 4.0
        %v393 = vsel %vm391, 1, 0
        %v394 = vsel %vm392, 1, 0
        %v395 = vcvt.s32.f32 %v393
        %v396 = vcvt.s32.f32 %v394
        %v397 = vmax.f32 %v340, 0.0
        %v400 = vcombine.low %v395, %v396
        %v402 = vmul.f32 %v340, %v400
        %v403 = vsub.f32 %v397, %v402
        %v404 = vand.u32 2147483647, %v340
        %v405 = vsub.f32 0.0, %v404
        %v406 = vmul.f32 %v405, 1.442695
        %v407 = vpow.pop %v406
        %v408 = vadd.f32 %v407, 1.0
        %v409 = vlog2.pop %v408
        %v410 = vmul.f32 %v409, 0.6931472
        %v411 = vmul.f32 -0.5, %v407
        %v412 = vadd.f32 %v411, 1.0
        %v413 = vmul.f32 %v412, %v407
        %v414 = vand.u32 2147483647, %v407
        %vm415 = vcmp.lt.f32.partialorder %v414, 0.0004427343
        %v416 = vsel %vm415, %v413, %v410
        %v417 = vadd.f32 %v403, %v416
        %v418 = vld [vmem:[#allocation2] sm:$0xf]
        %v420 = vcombine.high %v417, %v417
        %vm422 = vcmask 1043456
        %v423 = vsel %vm422, %v417, 0.0
        %v424 = vsel %vm422, %v420, 0.0
        %v425 = vadd.f32 %v423, %v424
        %426 = vadd.xlane.f32.xlu0 %v425
        %v427 = vpop.xlane.xlu0 %426
        %v428 = vadd.f32 %v418, %v427
        %vm429 = vcmask 3072
        %430 = vst.msk [vmem:[#allocation2] sm:$0xf] %vm429, %v428
        %v431 = vmul.f32 %v363, 0.25
        %v432 = vmul.f32 %v364, 0.25
        %v435 = vcombine.low %v431, %v432
        %v437 = vadd.f32 %v342, %v435
        %v438 = vand.u32 2147483647, %v437
        %v439 = vmul.f32 %v383, 0.25
        %v440 = vmul.f32 %v384, 0.25
        %v443 = vcombine.low %v439, %v440
        %v445 = vadd.f32 %v344, %v443
        %v446 = vand.u32 2147483647, %v445
        %v447 = vadd.f32 %v438, %v446
        %v448 = vld [vmem:[#allocation3] sm:$0xf]
        %v450 = vcombine.high %v447, %v447
        %v452 = vsel %vm391, %v447, 0.0
        %v453 = vsel %vm392, %v450, 0.0
        %v454 = vsel %vm422, %v452, 0.0
        %v455 = vsel %vm422, %v453, 0.0
        %v456 = vadd.f32 %v454, %v455
        %457 = vadd.xlane.f32.xlu0 %v456
        %v458 = vpop.xlane.xlu0 %457
        %v459 = vadd.f32 %v448, %v458
        %460 = vst.msk [vmem:[#allocation3] sm:$0xf] %vm429, %v459
        %v461 = vld [vmem:[#allocation4] sm:$0xf]
        %v462 = vsel %vm422, %v395, 0.0
        %v463 = vsel %vm422, %v396, 0.0
        %v464 = vadd.f32 %v462, %v463
        %465 = vadd.xlane.f32.xlu0 %v464
        %v466 = vpop.xlane.xlu0 %465
        %v467 = vadd.f32 %v461, %v466
        %468 = vst.msk [vmem:[#allocation4] sm:$0xf] %vm429, %v467
        // Predicated region
        $region49: #{tpu_custom_call.1} parent=39 // pred_check
          %p469 = pneg %p332
        $region50: #{tpu_custom_call.1} parent=39 // pred_check_branch
          %471 = sbr.rel (%p469) target = $region52
        $region51: #{tpu_custom_call.1} parent=39 // pred_region
          %v472 = vld [vmem:[#allocation2] sm:$0xf]
          %v473 = vmul.f32 %v472, 0.0078125
          %v474 = vld [vmem:[#allocation3] sm:$0xf]
          %v475 = vld [vmem:[#allocation4] sm:$0xf]
          %v476 = vrcp.pop %v475
          %v477 = vmul.f32 %v474, %v476
          %v478 = vadd.f32 %v473, %v477
          %479 = vst.msk [vmem:[%s331] sm:$0xf] %vm429, %v478
        $region52: #{tpu_custom_call.1} parent=39 // pred_fallthru
          _
        %p480 = scmp.lt.s32.totalorder %s23, 1
        %s481 = scalar_select %p480, %s23, 1
        %s482 = smul.addr %s481, 4
        %s483 = scalar_lea.vmem %s5, %s482
        // Predicated region
        $region53: #{tpu_custom_call.1} parent=39 // pred_check
          %p484 = pneg %p181
        $region54: #{tpu_custom_call.1} parent=39 // pred_check_branch
          %486 = sbr.rel (%p484) target = $region56
        $region55: #{tpu_custom_call.1} parent=39 // pred_region
          _
        $region56: #{tpu_custom_call.1} parent=39 // pred_fallthru
          _
      $region40: #{tpu_custom_call.1} parent=5 // pred_fallthru
        _
      %p487 = scmp.le.s32.totalorder 2, %s14
      // Predicated region
      $region57: #{tpu_custom_call.1} parent=5 // pred_check
        %p488 = pneg %p487
      $region58: #{tpu_custom_call.1} parent=5 // pred_check_branch
        %490 = sbr.rel (%p488) target = $region60
      $region59: #{tpu_custom_call.1} parent=5 // pred_region
        %s491 = ssub.s32 %s14, 2
        // Predicated region
        $region61: #{tpu_custom_call.1} parent=59 // pred_check
          %p492 = pneg %p187
        $region62: #{tpu_custom_call.1} parent=59 // pred_check_branch
          %494 = sbr.rel (%p492) target = $region64
        $region63: #{tpu_custom_call.1} parent=59 // pred_region
          %p495 = scmp.lt.s32.totalorder %s25, 1
          %s496 = scalar_select %p495, %s25, 1
          %s497 = smul.addr %s496, 4
          %s498 = scalar_lea.vmem %s5, %s497
        $region64: #{tpu_custom_call.1} parent=59 // pred_fallthru
          _
      $region60: #{tpu_custom_call.1} parent=5 // pred_fallthru
        _
    $region6: #{tpu_custom_call.1} parent=1 // loop_footer
      %s18 = sadd.s32 1, %s14
    $region7: #{tpu_custom_call.1} parent=1 // loop_footer_branch
      %13 = sbr.rel target = $region3
    $region8: #{tpu_custom_call.1} parent=1 // loop_exit
      _
    %499 = vsyncpa [#allocation6], 1
    %s500 = scalar_lea.sflag [#allocation6], 1
    %501 = vsyncpa %s500, 1

</llo_original>
